<compile_context>
chip_gen: v6e
topology: v6e:2x2x1
jax: 0.10.0
libtpu: 0.0.40
codegen_flags: <defaults>
</compile_context>

<pallas_src>
import functools
import math

import jax
import jax.numpy as jnp
from jax.experimental import pallas as pl
from jax.experimental.pallas import tpu as pltpu


_SQRT_2_OVER_PI = math.sqrt(2.0 / math.pi)


def _gelu_tanh(x):
    # tanh-form GELU: 0.5*x*(1 + tanh(sqrt(2/pi)*(x + 0.044715*x^3))).
    # Max abs deviation from exact-erf GELU (~1e-3) is well inside this
    # kernel's bf16-operand precision contract.
    return 0.5 * x * (1.0 + jnp.tanh(_SQRT_2_OVER_PI * (x + 0.044715 * x * x * x)))


def mlp_kernel(x_ref, w1_ref, b1_ref, w2_ref, b2_ref, o_ref, acc_ref):
    # x_ref:  (tm, Ci_p)   bf16 token-row tile
    # w1_ref: (Ci_p, th)   bf16 fc1 weight block (pre-transposed (in, out))
    # b1_ref: (1, th)      f32 fc1 bias block
    # w2_ref: (th, Co_p)   bf16 fc2 weight block (pre-transposed)
    # b2_ref: (1, Co_p)    f32 fc2 bias
    # acc_ref:(tm, Co_p)   f32 accumulator, carried across the hidden axis
    j = pl.program_id(1)

    @pl.when(j == 0)
    def _init():
        acc_ref[...] = jnp.zeros_like(acc_ref)

    # fc1 block + bias + GELU (f32 accumulation / epilogue).
    h = jnp.dot(x_ref[...], w1_ref[...], preferred_element_type=jnp.float32)
    h = _gelu_tanh(h + b1_ref[...])

    # fc2 partial product accumulated in f32.
    acc_ref[...] += jnp.dot(h.astype(w2_ref.dtype), w2_ref[...],
                            preferred_element_type=jnp.float32)

    # Epilogue: fc2 bias exactly once, lane-dense bf16 output store.
    @pl.when(j == pl.num_programs(1) - 1)
    def _finalize():
        o_ref[...] = (acc_ref[...] + b2_ref[...]).astype(o_ref.dtype)


def _round_up(v, m):
    return -(-v // m) * m


def _vmem_limit_bytes():
    """Per-generation VMEM budget: ~3/4 of physical, capped at 96 MiB."""
    try:
        cap = int(pltpu.get_tpu_info().vmem_capacity_bytes)
    except Exception:
        cap = 64 * 1024 * 1024  # conservative fallback (v7x per-TC size)
    return min(96 * 1024 * 1024, (cap * 3) // 4)


def prepare_mlp_params(w1, b1, w2, b2, *, th=512, max_th=None):
    """One-time weight prep (hoisted out of the per-call hot path).

    Pads feature dims to multiples of 128, chooses the hidden tile (full padded
    hidden dim if the bf16 weights fit ~1/3 of the VMEM budget, so they are
    fetched from HBM exactly once), casts weights to bf16 / biases to f32.
    Returns (padded arrays, meta) where meta holds the static ints the jitted
    forward needs.
    """
    C_in, H = w1.shape
    H2, C_out = w2.shape
    assert H2 == H and b1.shape == (H,) and b2.shape == (C_out,)

    Ci_p = _round_up(C_in, 128)
    Co_p = _round_up(C_out, 128)
    H_p128 = _round_up(H, 128)

    budget = _vmem_limit_bytes()
    weight_bytes = 2 * (Ci_p * H_p128 + H_p128 * Co_p)  # bf16 fc1 + fc2
    if max_th is not None:
        th_eff = min(_round_up(max_th, 128), H_p128)
    elif weight_bytes <= budget // 3:
        th_eff = H_p128            # single hidden grid step: weights DMA'd once
    else:
        th_eff = min(_round_up(th, 128), H_p128)
    H_p = _round_up(H, th_eff)

    w1p = jnp.pad(w1, ((0, Ci_p - C_in), (0, H_p - H))).astype(jnp.bfloat16)
    b1p = jnp.pad(b1, (0, H_p - H)).reshape(1, H_p).astype(jnp.float32)
    w2p = jnp.pad(w2, ((0, H_p - H), (0, Co_p - C_out))).astype(jnp.bfloat16)
    b2p = jnp.pad(b2, (0, Co_p - C_out)).reshape(1, Co_p).astype(jnp.float32)

    meta = dict(c_out=C_out, th=th_eff)
    return (w1p, b1p, w2p, b2p), meta


@functools.partial(jax.jit, static_argnames=("c_out", "th", "tm"))
def mlp_forward(x, w1p, b1p, w2p, b2p, *, c_out, th, tm=512):
    """x: (B, N, C_in) -> (B, N, c_out). Weights pre-padded/bf16 via prepare_mlp_params."""
    orig_dtype = x.dtype
    B, N, C_in = x.shape
    Ci_p, H_p = w1p.shape
    Co_p = w2p.shape[1]
    assert H_p % th == 0
    T = B * N

    # Row tile: multiple of 16 (bf16 row packing); if only one row tile would
    # result, halve it so both v7x TensorCores get work on the parallel axis.
    tm_eff = min(tm, _round_up(T, 16))
    if _round_up(T, tm_eff) // tm_eff < 2:
        half = max(16, _round_up(tm_eff // 2, 16))
        if half < tm_eff and _round_up(T, half) // half >= 2:
            tm_eff = half
    T_p = _round_up(T, tm_eff)

    x2 = x.reshape(T, C_in)
    if T_p != T or Ci_p != C_in:
        x2 = jnp.pad(x2, ((0, T_p - T), (0, Ci_p - C_in)))
    if x2.dtype != jnp.bfloat16:
        x2 = x2.astype(jnp.bfloat16)

    grid = (T_p // tm_eff, H_p // th)

    flops = 2 * T_p * H_p * (Ci_p + Co_p)
    bytes_accessed = (T_p * Ci_p * 2            # x (bf16)
                      + Ci_p * H_p * 2          # w1 (bf16)
                      + H_p * Co_p * 2          # w2 (bf16)
                      + (H_p + Co_p) * 4        # biases (f32)
                      + T_p * Co_p * 2)         # output (bf16)

    out = pl.pallas_call(
        mlp_kernel,
        out_shape=jax.ShapeDtypeStruct((T_p, Co_p), jnp.bfloat16),
        grid_spec=pltpu.PrefetchScalarGridSpec(
            num_scalar_prefetch=0,
            grid=grid,
            in_specs=[
                pl.BlockSpec((tm_eff, Ci_p), lambda i, j: (i, 0)),
                pl.BlockSpec((Ci_p, th), lambda i, j: (0, j)),
                pl.BlockSpec((1, th), lambda i, j: (0, j)),
                pl.BlockSpec((th, Co_p), lambda i, j: (j, 0)),
                pl.BlockSpec((1, Co_p), lambda i, j: (0, 0)),
            ],
            out_specs=pl.BlockSpec((tm_eff, Co_p), lambda i, j: (i, 0)),
            scratch_shapes=[pltpu.VMEM((tm_eff, Co_p), jnp.float32)],
        ),
        compiler_params=pltpu.CompilerParams(
            dimension_semantics=("parallel", "arbitrary"),
            vmem_limit_bytes=_vmem_limit_bytes(),
        ),
        cost_estimate=pl.CostEstimate(
            flops=flops,
            transcendentals=T_p * H_p,
            bytes_accessed=bytes_accessed,
        ),
    )(x2, w1p, b1p, w2p, b2p)

    if T_p != T or Co_p != c_out:
        out = out[:T, :c_out]
    out = out.reshape(B, N, c_out)
    if out.dtype != orig_dtype:
        out = out.astype(orig_dtype)
    return out


def init_mlp_params(key, in_features, hidden_features, out_features):
    """Mirror the PyTorch module's init.

    fc weights: trunc_normal(std=0.02) (truncation at +/-2 absolute is never
    hit at std=0.02, so normal*0.02 is equivalent).
    fc biases: nn.Linear default U(-1/sqrt(fan_in), 1/sqrt(fan_in)).
    Weights stored transposed: (in, out).
    """
    k1, k2, k3, k4 = jax.random.split(key, 4)
    w1 = (0.02 * jax.random.normal(k1, (in_features, hidden_features))).astype(jnp.float32)
    w2 = (0.02 * jax.random.normal(k2, (hidden_features, out_features))).astype(jnp.float32)
    bound1 = 1.0 / math.sqrt(in_features)
    bound2 = 1.0 / math.sqrt(hidden_features)
    b1 = jax.random.uniform(k3, (hidden_features,), minval=-bound1, maxval=bound1).astype(jnp.float32)
    b2 = jax.random.uniform(k4, (out_features,), minval=-bound2, maxval=bound2).astype(jnp.float32)
    return w1, b1, w2, b2


if __name__ == "__main__":
    B, N = 2, 8                      # batch, sequence length (tokens)
    C_in, H, C_out = 128, 256, 128   # lane-dense feature dims (multiples of 128)

    key = jax.random.PRNGKey(0)
    kx, kp = jax.random.split(key)
    x = jax.random.normal(kx, (B, N, C_in), dtype=jnp.float32)
    w1, b1, w2, b2 = init_mlp_params(kp, C_in, H, C_out)

    # Pure-JAX f32 reference (exact-erf GELU, matching nn.GELU default).
    hf = x.reshape(-1, C_in) @ w1 + b1
    hf = 0.5 * hf * (1.0 + jax.scipy.special.erf(hf / jnp.float32(math.sqrt(2.0))))
    ref = (hf @ w2 + b2).reshape(B, N, C_out)

    # Path 1: weights fit the VMEM budget -> single hidden grid step,
    # weights fetched from HBM exactly once.
    (w1p, b1p, w2p, b2p), meta = prepare_mlp_params(w1, b1, w2, b2)
    out = mlp_forward(x, w1p, b1p, w2p, b2p, c_out=meta["c_out"], th=meta["th"])
    jax.block_until_ready(out)
    assert out.shape == (B, N, C_out)
    err = float(jnp.max(jnp.abs(out - ref)))
    assert jnp.allclose(out, ref, atol=2e-2, rtol=2e-2), err

    # Path 2: force a small hidden tile so the hidden grid axis runs >1 step
    # and exercises the f32 accumulator + pl.when init/finalize path.
    (w1p2, b1p2, w2p2, b2p2), meta2 = prepare_mlp_params(w1, b1, w2, b2, max_th=128)
    out2 = mlp_forward(x, w1p2, b1p2, w2p2, b2p2,
                       c_out=meta2["c_out"], th=meta2["th"], tm=256)
    jax.block_until_ready(out2)
    err2 = float(jnp.max(jnp.abs(out2 - ref)))
    assert jnp.allclose(out2, ref, atol=2e-2, rtol=2e-2), err2

    print("KERNEL_OK")
</pallas_src>

<mosaic_0001>
module attributes {stable_mosaic.version = 11 : i64} {
  func.func @mlp_kernel(%arg0: i32, %arg1: i32, %arg2: memref<16x128xbf16, #tpu.memory_space<vmem>>, %arg3: memref<128x256xbf16, #tpu.memory_space<vmem>>, %arg4: memref<1x256xf32, #tpu.memory_space<vmem>>, %arg5: memref<256x128xbf16, #tpu.memory_space<vmem>>, %arg6: memref<1x128xf32, #tpu.memory_space<vmem>>, %arg7: memref<16x128xbf16, #tpu.memory_space<vmem>>, %arg8: memref<16x128xf32, #tpu.memory_space<vmem>>) attributes {dimension_semantics = [#tpu.dimension_semantics<parallel>, #tpu.dimension_semantics<arbitrary>], iteration_bounds = array<i64: 1, 1>, scalar_prefetch = 0 : i64, scratch_operands = 1 : i64, tpu.core_type = #tpu.core_type<tc>, window_params = [{transform_indices = @transform_0, window_bounds = array<i64: 16, 128>}, {transform_indices = @transform_1, window_bounds = array<i64: 128, 256>}, {transform_indices = @transform_2, window_bounds = array<i64: 1, 256>}, {transform_indices = @transform_3, window_bounds = array<i64: 256, 128>}, {pipeline_mode = #tpu.pipeline_mode<synchronous>, transform_indices = @transform_4, window_bounds = array<i64: 1, 128>}, {transform_indices = @transform_5, window_bounds = array<i64: 16, 128>}]} {
    %c0_i32 = arith.constant 0 : i32
    %0 = arith.cmpi eq, %arg1, %c0_i32 : i32
    %1 = arith.extui %0 : i1 to i32
    %c0_i32_0 = arith.constant 0 : i32
    %2 = arith.cmpi ne, %1, %c0_i32_0 : i32
    scf.if %2 {
      %cst_19 = arith.constant 0.000000e+00 : f32
      %31 = vector.broadcast %cst_19 : f32 to vector<16x128xf32>
      %c0_20 = arith.constant 0 : index
      %c0_21 = arith.constant 0 : index
      %32 = vector.load %arg8[%c0_20, %c0_21] : memref<16x128xf32, #tpu.memory_space<vmem>>, vector<16x128xf32>
      tpu.vector_store %arg8[%c0_20, %c0_21], %31 {strides = array<i32>} : memref<16x128xf32, #tpu.memory_space<vmem>>, vector<16x128xf32>,
    } else {
    }
    %c0 = arith.constant 0 : index
    %c0_1 = arith.constant 0 : index
    %3 = vector.load %arg2[%c0, %c0_1] : memref<16x128xbf16, #tpu.memory_space<vmem>>, vector<16x128xbf16>
    %c0_2 = arith.constant 0 : index
    %c0_3 = arith.constant 0 : index
    %4 = vector.load %arg3[%c0_2, %c0_3] : memref<128x256xbf16, #tpu.memory_space<vmem>>, vector<128x256xbf16>
    %cst = arith.constant dense<0.000000e+00> : vector<16x256xf32>
    %5 = tpu.matmul %3, %4, %cst {dimension_numbers = #tpu.dot_dimension_numbers<[1], [0], [0], [1], [0, 0, 1, 1], [], []>} : vector<16x128xbf16>, vector<128x256xbf16>, vector<16x256xf32> -> vector<16x256xf32>
    %c0_4 = arith.constant 0 : index
    %c0_5 = arith.constant 0 : index
    %6 = vector.load %arg4[%c0_4, %c0_5] : memref<1x256xf32, #tpu.memory_space<vmem>>, vector<1x256xf32>
    %7 = vector.broadcast %6 : vector<1x256xf32> to vector<16x256xf32>
    %8 = arith.addf %5, %7 : vector<16x256xf32>
    %cst_6 = arith.constant 5.000000e-01 : f32
    %9 = vector.broadcast %cst_6 : f32 to vector<16x256xf32>
    %10 = arith.mulf %9, %8 : vector<16x256xf32>
    %cst_7 = arith.constant 4.471500e-02 : f32
    %11 = vector.broadcast %cst_7 : f32 to vector<16x256xf32>
    %12 = arith.mulf %11, %8 : vector<16x256xf32>
    %13 = arith.mulf %12, %8 : vector<16x256xf32>
    %14 = arith.mulf %13, %8 : vector<16x256xf32>
    %15 = arith.addf %8, %14 : vector<16x256xf32>
    %cst_8 = arith.constant 0.797884583 : f32
    %16 = vector.broadcast %cst_8 : f32 to vector<16x256xf32>
    %17 = arith.mulf %16, %15 : vector<16x256xf32>
    %18 = math.tanh %17 : vector<16x256xf32>
    %cst_9 = arith.constant 1.000000e+00 : f32
    %19 = vector.broadcast %cst_9 : f32 to vector<16x256xf32>
    %20 = arith.addf %19, %18 : vector<16x256xf32>
    %21 = arith.mulf %10, %20 : vector<16x256xf32>
    %c0_10 = arith.constant 0 : index
    %c0_11 = arith.constant 0 : index
    %22 = vector.load %arg8[%c0_10, %c0_11] : memref<16x128xf32, #tpu.memory_space<vmem>>, vector<16x128xf32>
    %23 = arith.truncf %21 : vector<16x256xf32> to vector<16x256xbf16>
    %c0_12 = arith.constant 0 : index
    %c0_13 = arith.constant 0 : index
    %24 = vector.load %arg5[%c0_12, %c0_13] : memref<256x128xbf16, #tpu.memory_space<vmem>>, vector<256x128xbf16>
    %cst_14 = arith.constant dense<0.000000e+00> : vector<16x128xf32>
    %25 = tpu.matmul %23, %24, %cst_14 {dimension_numbers = #tpu.dot_dimension_numbers<[1], [0], [0], [1], [0, 0, 1, 1], [], []>} : vector<16x256xbf16>, vector<256x128xbf16>, vector<16x128xf32> -> vector<16x128xf32>
    %26 = arith.addf %22, %25 : vector<16x128xf32>
    %c0_15 = arith.constant 0 : index
    %c0_16 = arith.constant 0 : index
    %27 = vector.load %arg8[%c0_15, %c0_16] : memref<16x128xf32, #tpu.memory_space<vmem>>, vector<16x128xf32>
    tpu.vector_store %arg8[%c0_15, %c0_16], %26 {strides = array<i32>} : memref<16x128xf32, #tpu.memory_space<vmem>>, vector<16x128xf32>,
    %c0_i32_17 = arith.constant 0 : i32
    %28 = arith.cmpi eq, %arg1, %c0_i32_17 : i32
    %29 = arith.extui %28 : i1 to i32
    %c0_i32_18 = arith.constant 0 : i32
    %30 = arith.cmpi ne, %29, %c0_i32_18 : i32
    scf.if %30 {
      %c0_19 = arith.constant 0 : index
      %c0_20 = arith.constant 0 : index
      %31 = vector.load %arg8[%c0_19, %c0_20] : memref<16x128xf32, #tpu.memory_space<vmem>>, vector<16x128xf32>
      %c0_21 = arith.constant 0 : index
      %c0_22 = arith.constant 0 : index
      %32 = vector.load %arg6[%c0_21, %c0_22] : memref<1x128xf32, #tpu.memory_space<vmem>>, vector<1x128xf32>
      %33 = vector.broadcast %32 : vector<1x128xf32> to vector<16x128xf32>
      %34 = arith.addf %31, %33 : vector<16x128xf32>
      %35 = arith.truncf %34 : vector<16x128xf32> to vector<16x128xbf16>
      %c0_23 = arith.constant 0 : index
      %c0_24 = arith.constant 0 : index
      %36 = vector.load %arg7[%c0_23, %c0_24] : memref<16x128xbf16, #tpu.memory_space<vmem>>, vector<16x128xbf16>
      tpu.vector_store %arg7[%c0_23, %c0_24], %35 {strides = array<i32>} : memref<16x128xbf16, #tpu.memory_space<vmem>>, vector<16x128xbf16>,
    } else {
    }
    return
  }
  func.func @transform_0(%arg0: i32, %arg1: i32) -> (i32, i32) {
    %c0_i32 = arith.constant 0 : i32
    %c0_i32_0 = arith.constant 0 : i32
    return %arg0, %c0_i32 : i32, i32
  }
  func.func @transform_1(%arg0: i32, %arg1: i32) -> (i32, i32) {
    %c0_i32 = arith.constant 0 : i32
    %c0_i32_0 = arith.constant 0 : i32
    return %c0_i32, %arg1 : i32, i32
  }
  func.func @transform_2(%arg0: i32, %arg1: i32) -> (i32, i32) {
    %c0_i32 = arith.constant 0 : i32
    %c0_i32_0 = arith.constant 0 : i32
    return %c0_i32, %arg1 : i32, i32
  }
  func.func @transform_3(%arg0: i32, %arg1: i32) -> (i32, i32) {
    %c0_i32 = arith.constant 0 : i32
    %c0_i32_0 = arith.constant 0 : i32
    return %arg1, %c0_i32 : i32, i32
  }
  func.func @transform_4(%arg0: i32, %arg1: i32) -> (i32, i32) {
    %c0_i32 = arith.constant 0 : i32
    %c0_i32_0 = arith.constant 0 : i32
    %c0_i32_1 = arith.constant 0 : i32
    return %c0_i32, %c0_i32_0 : i32, i32
  }
  func.func @transform_5(%arg0: i32, %arg1: i32) -> (i32, i32) {
    %c0_i32 = arith.constant 0 : i32
    %c0_i32_0 = arith.constant 0 : i32
    return %arg0, %c0_i32 : i32, i32
  }
}

</mosaic_0001>

<llo_original>
// kernel: mlp_forward.1
$region0: #{mlp_forward.1}
  #allocation0 [shape = 'u32[]', space=smem, size = 0x4, offset = 0x4, fixed_abs, tag = 'smem constant byte address 0x4 - core index']
  #allocation1 [shape = 'u32[144,128]{1,0:T(1,128)}', space=vmem, size = 0x12000, scoped, tag = 'internal scratch']
  #allocation2 [shape = 'f32[16,128]{1,0:T(8,128)}', space=vmem, size = 0x2000, scoped, tag = 'scratch operand']
  %s0 = inlined_call_operand.vmem [shape: bf16[16,128], index: 0, kind: input, shape index: {}]
  %s1 = inlined_call_operand.hbm [shape: bf16[128,256], index: 1, kind: input, shape index: {}]
  %s2 = inlined_call_operand.vmem [shape: f32[1,256], index: 2, kind: input, shape index: {}]
  %s3 = inlined_call_operand.hbm [shape: bf16[256,128], index: 3, kind: input, shape index: {}]
  %s4 = inlined_call_operand.vmem [shape: f32[1,128], index: 4, kind: input, shape index: {}]
  %s5 = inlined_call_operand.vmem [shape: bf16[16,128], index: 5, kind: output, shape index: {}]
  %s6 = sld [smem:[#allocation0]]
  $region46: #{mlp_forward.1} parent=0
    _
  %s8 = ssub.s32 1, %s6
  %s9 = scalar_select 0, %s8, %s6
  $region1: #{mlp_forward.1} parent=0
    #allocation3 [shape = 'u8[65536]{0}', space=vmem, size = 0x10000, scoped, tag = 'input window, operand 1, single buffered']
    #allocation4 [shape = 's32[1]{0}', space=sflag, size = 0x4, scoped, tag = 'scoped memory for mlp_forward.1']
    #allocation5 [shape = 'u8[65536]{0}', space=vmem, size = 0x10000, scoped, tag = 'input window, operand 3, single buffered']
    #allocation6 [shape = 's32[1]{0}', space=sflag, size = 0x4, scoped, tag = 'scoped memory for mlp_forward.1']
    %10 = vsyncpa [#allocation4], 0
    %11 = vsyncpa [#allocation6], 0
    // Predicated region
    $region2: #{mlp_forward.1} parent=1 // pred_check
      _
    $region3: #{mlp_forward.1} parent=1 // pred_check_branch
      %13 = sbr.rel (0) target = $region5
    $region4: #{mlp_forward.1} parent=1 // pred_region
      _
    $region5: #{mlp_forward.1} parent=1 // pred_fallthru
      _
    // Predicated region
    $region6: #{mlp_forward.1} parent=1 // pred_check
      _
    $region7: #{mlp_forward.1} parent=1 // pred_check_branch
      %15 = sbr.rel (0) target = $region9
    $region8: #{mlp_forward.1} parent=1 // pred_region
      %s17 = ssub.s32 2048, 2048
      %18 = vsyncadd [#allocation4], %s17
      %s19 = sshll.u32 [#allocation3], 4
      %s20 = int_to_ptr.vmem [resolvable:$true] %s19
      %25 = dma.hbm_to_vmem [thread:$0]  %s1, 2048, %s20, [#allocation4], 128, 128, 8
    $region9: #{mlp_forward.1} parent=1 // pred_fallthru
      _
    // Predicated region
    $region10: #{mlp_forward.1} parent=1 // pred_check
      _
    $region11: #{mlp_forward.1} parent=1 // pred_check_branch
      %27 = sbr.rel (0) target = $region13
    $region12: #{mlp_forward.1} parent=1 // pred_region
      _
    $region13: #{mlp_forward.1} parent=1 // pred_fallthru
      _
    // Predicated region
    $region14: #{mlp_forward.1} parent=1 // pred_check
      _
    $region15: #{mlp_forward.1} parent=1 // pred_check_branch
      %29 = sbr.rel (0) target = $region17
    $region16: #{mlp_forward.1} parent=1 // pred_region
      %s31 = ssub.s32 2048, 2048
      %32 = vsyncadd [#allocation6], %s31
      %s33 = sshll.u32 [#allocation5], 4
      %s34 = int_to_ptr.vmem [resolvable:$true] %s33
      %39 = dma.hbm_to_vmem [thread:$0]  %s3, 2048, %s34, [#allocation6], 64, 64, 4
    $region17: #{mlp_forward.1} parent=1 // pred_fallthru
      _
    // Predicated region
    $region18: #{mlp_forward.1} parent=1 // pred_check
      _
    $region19: #{mlp_forward.1} parent=1 // pred_check_branch
      %41 = sbr.rel (0) target = $region21
    $region20: #{mlp_forward.1} parent=1 // pred_region
      _
    $region21: #{mlp_forward.1} parent=1 // pred_fallthru
      _
    // Predicated region
    $region22: #{mlp_forward.1} parent=1 // pred_check
      _
    $region23: #{mlp_forward.1} parent=1 // pred_check_branch
      %43 = sbr.rel (0) target = $region25
    $region24: #{mlp_forward.1} parent=1 // pred_region
      %44 = dma.done [#allocation4], 2048
    $region25: #{mlp_forward.1} parent=1 // pred_fallthru
      _
    // Predicated region
    $region26: #{mlp_forward.1} parent=1 // pred_check
      _
    $region27: #{mlp_forward.1} parent=1 // pred_check_branch
      %46 = sbr.rel (0) target = $region29
    $region28: #{mlp_forward.1} parent=1 // pred_region
      %47 = dma.done [#allocation6], 2048
    $region29: #{mlp_forward.1} parent=1 // pred_fallthru
      _
    %p49 = scmp.eq.s32.totalorder 0, 0
    // Predicated region
    $region30: #{mlp_forward.1} parent=1 // pred_check
      %p50 = pneg %p49
    $region31: #{mlp_forward.1} parent=1 // pred_check_branch
      %52 = sbr.rel (%p50) target = $region33
    $region32: #{mlp_forward.1} parent=1 // pred_region
      %53 = vst [vmem:[#allocation2] sm:$0xff] 0.0
      %54 = vst [vmem:[#allocation2 + $0x8] sm:$0xff] 0.0
    $region33: #{mlp_forward.1} parent=1 // pred_fallthru
      _
    %v55 = vld [vmem:[%s0] sm:$0xf]
    %v56 = vld [vmem:[%s0 + $0x4] sm:$0xf]
    %v57 = vld [vmem:[#allocation3] sm:$0xff]
    %v58 = vld [vmem:[#allocation3 + $0x8] sm:$0xff]
    %v59 = vld [vmem:[#allocation3 + $0x10] sm:$0xff]
    %v60 = vld [vmem:[#allocation3 + $0x18] sm:$0xff]
    %v61 = vld [vmem:[#allocation3 + $0x20] sm:$0xff]
    %v62 = vld [vmem:[#allocation3 + $0x28] sm:$0xff]
    %v63 = vld [vmem:[#allocation3 + $0x30] sm:$0xff]
    %v64 = vld [vmem:[#allocation3 + $0x38] sm:$0xff]
    %v65 = vld [vmem:[#allocation3 + $0x40] sm:$0xff]
    %v66 = vld [vmem:[#allocation3 + $0x48] sm:$0xff]
    %v67 = vld [vmem:[#allocation3 + $0x50] sm:$0xff]
    %v68 = vld [vmem:[#allocation3 + $0x58] sm:$0xff]
    %v69 = vld [vmem:[#allocation3 + $0x60] sm:$0xff]
    %v70 = vld [vmem:[#allocation3 + $0x68] sm:$0xff]
    %v71 = vld [vmem:[#allocation3 + $0x70] sm:$0xff]
    %v72 = vld [vmem:[#allocation3 + $0x78] sm:$0xff]
    %v73 = vld [vmem:[%s2] sm:$0x3]
    %v75 = vlaneseq
    %v76 = vshrl.u32 %v75, 7
    %v77 = vsub.s32 0, %v76
    %v78 = vrot.slane %v73, %v77
    %v79 = vlaneseq
    %v80 = vshrl.u32 %v79, 7
    %v81 = vsub.s32 1, %v80
    %v82 = vrot.slane %v73, %v81
    %v87 = vunpack.c.l.b16 %v55
    %v88 = vunpack.c.l.b16 %v56
    %v89 = vpack.c.b16 %v88, %v87
    %v107 = vunpack.c.l.b16 %v57
    %v108 = vunpack.c.h.b16 %v57
    %v109 = vunpack.c.l.b16 %v58
    %v110 = vunpack.c.h.b16 %v58
    %v111 = vunpack.c.l.b16 %v59
    %v112 = vunpack.c.h.b16 %v59
    %v113 = vunpack.c.l.b16 %v60
    %v114 = vunpack.c.h.b16 %v60
    %v115 = vunpack.c.l.b16 %v61
    %v116 = vunpack.c.h.b16 %v61
    %v117 = vunpack.c.l.b16 %v62
    %v118 = vunpack.c.h.b16 %v62
    %v119 = vunpack.c.l.b16 %v63
    %v120 = vunpack.c.h.b16 %v63
    %v121 = vunpack.c.l.b16 %v64
    %v122 = vunpack.c.h.b16 %v64
    %v123 = vunpack.c.l.b16 %v65
    %v124 = vunpack.c.h.b16 %v65
    %v125 = vunpack.c.l.b16 %v66
    %v126 = vunpack.c.h.b16 %v66
    %v127 = vunpack.c.l.b16 %v67
    %v128 = vunpack.c.h.b16 %v67
    %v129 = vunpack.c.l.b16 %v68
    %v130 = vunpack.c.h.b16 %v68
    %v131 = vunpack.c.l.b16 %v69
    %v132 = vunpack.c.h.b16 %v69
    %v133 = vunpack.c.l.b16 %v70
    %v134 = vunpack.c.h.b16 %v70
    %v135 = vunpack.c.l.b16 %v71
    %v136 = vunpack.c.h.b16 %v71
    %v137 = vunpack.c.l.b16 %v72
    %v138 = vunpack.c.h.b16 %v72
    %v139 = vpack.c.b16 %v109, %v107
    %v140 = vpack.c.b16 %v110, %v108
    %v141 = vpack.c.b16 %v113, %v111
    %v142 = vpack.c.b16 %v114, %v112
    %v143 = vpack.c.b16 %v117, %v115
    %v144 = vpack.c.b16 %v118, %v116
    %v145 = vpack.c.b16 %v121, %v119
    %v146 = vpack.c.b16 %v122, %v120
    %v147 = vpack.c.b16 %v125, %v123
    %v148 = vpack.c.b16 %v126, %v124
    %v149 = vpack.c.b16 %v129, %v127
    %v150 = vpack.c.b16 %v130, %v128
    %v151 = vpack.c.b16 %v133, %v131
    %v152 = vpack.c.b16 %v134, %v132
    %v153 = vpack.c.b16 %v137, %v135
    %v154 = vpack.c.b16 %v138, %v136
    %171 = vmatprep.subr.bf16.mxu0 %v154
    %172 = vmatpush1.bf16.msra.mxu0 %v153
    %173 = vmatprep.subr.bf16.mxu0 %v152
    %174 = vmatpush1.bf16.msra.mxu0 %v151
    %175 = vmatprep.subr.bf16.mxu0 %v150
    %176 = vmatpush1.bf16.msra.mxu0 %v149
    %177 = vmatprep.subr.bf16.mxu0 %v148
    %178 = vmatpush1.bf16.msra.mxu0 %v147
    %179 = vmatprep.subr.bf16.mxu0 %v146
    %180 = vmatpush1.bf16.msra.mxu0 %v145
    %181 = vmatprep.subr.bf16.mxu0 %v144
    %182 = vmatpush1.bf16.msra.mxu0 %v143
    %183 = vmatprep.subr.bf16.mxu0 %v142
    %184 = vmatpush1.bf16.msra.mxu0 %v141
    %185 = vmatprep.subr.bf16.mxu0 %v140
    %186 = vmatpush1.bf16.msra.mxu0 %v139
    %187 = vmatprep.subr.bf16.mxu0 0
    %188 = vmatpush2.bf16.msra.mxu0 0
    %189 = vmatprep.subr.bf16.mxu0 0
    %190 = vmatpush2.bf16.msra.mxu0 0
    %191 = vmatprep.subr.bf16.mxu0 0
    %192 = vmatpush2.bf16.msra.mxu0 0
    %193 = vmatprep.subr.bf16.mxu0 0
    %194 = vmatpush2.bf16.msra.mxu0 0
    %195 = vmatprep.subr.bf16.mxu0 0
    %196 = vmatpush2.bf16.msra.mxu0 0
    %197 = vmatprep.subr.bf16.mxu0 0
    %198 = vmatpush2.bf16.msra.mxu0 0
    %199 = vmatprep.subr.bf16.mxu0 0
    %200 = vmatpush2.bf16.msra.mxu0 0
    %201 = vmatprep.subr.bf16.mxu0 0
    %202 = vmatpush2.bf16.msra.mxu0 0
    %203 = vmatprep.mubr.bf16.mxu0 0
    %204 = vmatmul.mubr.bf16.gmra.mxu0 %v89
    %v205 = vpop.f32.mrf.mxu0
    %v206 = vadd.f32 %v78, %v205
    %v207 = vpop.f32.mrf.mxu0
    %v208 = vadd.f32 %v82, %v207
    %v209 = vpop.f32.mrf.mxu0
    %v210 = vadd.f32 %v78, %v209
    %v211 = vpop.f32.mrf.mxu0
    %v212 = vadd.f32 %v82, %v211
    %213 = vdwg.mxu0
    %v214 = vmul.f32 %v206, 0.5
    %v215 = vmul.f32 %v208, 0.5
    %v216 = vmul.f32 %v210, 0.5
    %v217 = vmul.f32 %v212, 0.5
    %v218 = vmul.f32 %v206, 0.044715
    %v219 = vmul.f32 %v208, 0.044715
    %v220 = vmul.f32 %v210, 0.044715
    %v221 = vmul.f32 %v212, 0.044715
    %v222 = vmul.f32 %v218, %v206
    %v223 = vmul.f32 %v219, %v208
    %v224 = vmul.f32 %v220, %v210
    %v225 = vmul.f32 %v221, %v212
    %v226 = vmul.f32 %v222, %v206
    %v227 = vmul.f32 %v223, %v208
    %v228 = vmul.f32 %v224, %v210
    %v229 = vmul.f32 %v225, %v212
    %v230 = vadd.f32 %v206, %v226
    %v231 = vadd.f32 %v208, %v227
    %v232 = vadd.f32 %v210, %v228
    %v233 = vadd.f32 %v212, %v229
    %v234 = vmul.f32 %v230, 0.7978846
    %v235 = vmul.f32 %v231, 0.7978846
    %v236 = vmul.f32 %v232, 0.7978846
    %v237 = vmul.f32 %v233, 0.7978846
    %v238 = vtanh.pop %v234
    %v239 = vtanh.pop %v235
    %v240 = vtanh.pop %v236
    %v241 = vtanh.pop %v237
    %v242 = vadd.f32 %v238, 1.0
    %v243 = vadd.f32 %v239, 1.0
    %v244 = vadd.f32 %v240, 1.0
    %v245 = vadd.f32 %v241, 1.0
    %v246 = vmul.f32 %v214, %v242
    %v247 = vmul.f32 %v215, %v243
    %v248 = vmul.f32 %v216, %v244
    %v249 = vmul.f32 %v217, %v245
    %v250 = vld [vmem:[#allocation2] sm:$0xff]
    %v251 = vld [vmem:[#allocation2 + $0x8] sm:$0xff]
    %v252 = vpack.c.bf16 %v248, %v246
    %v253 = vpack.c.bf16 %v249, %v247
    %v254 = vld [vmem:[#allocation5] sm:$0xf]
    %v255 = vld [vmem:[#allocation5 + $0x4] sm:$0xf]
    %v256 = vld [vmem:[#allocation5 + $0x8] sm:$0xf]
    %v257 = vld [vmem:[#allocation5 + $0xc] sm:$0xf]
    %v258 = vld [vmem:[#allocation5 + $0x10] sm:$0xf]
    %v259 = vld [vmem:[#allocation5 + $0x14] sm:$0xf]
    %v260 = vld [vmem:[#allocation5 + $0x18] sm:$0xf]
    %v261 = vld [vmem:[#allocation5 + $0x1c] sm:$0xf]
    %v262 = vld [vmem:[#allocation5 + $0x20] sm:$0xf]
    %v263 = vld [vmem:[#allocation5 + $0x24] sm:$0xf]
    %v264 = vld [vmem:[#allocation5 + $0x28] sm:$0xf]
    %v265 = vld [vmem:[#allocation5 + $0x2c] sm:$0xf]
    %v266 = vld [vmem:[#allocation5 + $0x30] sm:$0xf]
    %v267 = vld [vmem:[#allocation5 + $0x34] sm:$0xf]
    %v268 = vld [vmem:[#allocation5 + $0x38] sm:$0xf]
    %v269 = vld [vmem:[#allocation5 + $0x3c] sm:$0xf]
    %v270 = vld [vmem:[#allocation5 + $0x40] sm:$0xf]
    %v271 = vld [vmem:[#allocation5 + $0x44] sm:$0xf]
    %v272 = vld [vmem:[#allocation5 + $0x48] sm:$0xf]
    %v273 = vld [vmem:[#allocation5 + $0x4c] sm:$0xf]
    %v274 = vld [vmem:[#allocation5 + $0x50] sm:$0xf]
    %v275 = vld [vmem:[#allocation5 + $0x54] sm:$0xf]
    %v276 = vld [vmem:[#allocation5 + $0x58] sm:$0xf]
    %v277 = vld [vmem:[#allocation5 + $0x5c] sm:$0xf]
    %v278 = vld [vmem:[#allocation5 + $0x60] sm:$0xf]
    %v279 = vld [vmem:[#allocation5 + $0x64] sm:$0xf]
    %v280 = vld [vmem:[#allocation5 + $0x68] sm:$0xf]
    %v281 = vld [vmem:[#allocation5 + $0x6c] sm:$0xf]
    %v282 = vld [vmem:[#allocation5 + $0x70] sm:$0xf]
    %v283 = vld [vmem:[#allocation5 + $0x74] sm:$0xf]
    %v284 = vld [vmem:[#allocation5 + $0x78] sm:$0xf]
    %v285 = vld [vmem:[#allocation5 + $0x7c] sm:$0xf]
    %v318 = vunpack.c.l.b16 %v254
    %v319 = vunpack.c.l.b16 %v255
    %v320 = vunpack.c.l.b16 %v256
    %v321 = vunpack.c.l.b16 %v257
    %v322 = vunpack.c.l.b16 %v258
    %v323 = vunpack.c.l.b16 %v259
    %v324 = vunpack.c.l.b16 %v260
    %v325 = vunpack.c.l.b16 %v261
    %v326 = vunpack.c.l.b16 %v262
    %v327 = vunpack.c.l.b16 %v263
    %v328 = vunpack.c.l.b16 %v264
    %v329 = vunpack.c.l.b16 %v265
    %v330 = vunpack.c.l.b16 %v266
    %v331 = vunpack.c.l.b16 %v267
    %v332 = vunpack.c.l.b16 %v268
    %v333 = vunpack.c.l.b16 %v269
    %v334 = vunpack.c.l.b16 %v270
    %v335 = vunpack.c.l.b16 %v271
    %v336 = vunpack.c.l.b16 %v272
    %v337 = vunpack.c.l.b16 %v273
    %v338 = vunpack.c.l.b16 %v274
    %v339 = vunpack.c.l.b16 %v275
    %v340 = vunpack.c.l.b16 %v276
    %v341 = vunpack.c.l.b16 %v277
    %v342 = vunpack.c.l.b16 %v278
    %v343 = vunpack.c.l.b16 %v279
    %v344 = vunpack.c.l.b16 %v280
    %v345 = vunpack.c.l.b16 %v281
    %v346 = vunpack.c.l.b16 %v282
    %v347 = vunpack.c.l.b16 %v283
    %v348 = vunpack.c.l.b16 %v284
    %v349 = vunpack.c.l.b16 %v285
    %v350 = vpack.c.b16 %v319, %v318
    %v351 = vpack.c.b16 %v321, %v320
    %v352 = vpack.c.b16 %v323, %v322
    %v353 = vpack.c.b16 %v325, %v324
    %v354 = vpack.c.b16 %v327, %v326
    %v355 = vpack.c.b16 %v329, %v328
    %v356 = vpack.c.b16 %v331, %v330
    %v357 = vpack.c.b16 %v333, %v332
    %v358 = vpack.c.b16 %v335, %v334
    %v359 = vpack.c.b16 %v337, %v336
    %v360 = vpack.c.b16 %v339, %v338
    %v361 = vpack.c.b16 %v341, %v340
    %v362 = vpack.c.b16 %v343, %v342
    %v363 = vpack.c.b16 %v345, %v344
    %v364 = vpack.c.b16 %v347, %v346
    %v365 = vpack.c.b16 %v349, %v348
    %382 = vmatprep.subr.bf16.mxu0 0
    %383 = vmatpush1.bf16.msra.mxu0 %v357
    %384 = vmatprep.subr.bf16.mxu0 0
    %385 = vmatpush1.bf16.msra.mxu0 %v356
    %386 = vmatprep.subr.bf16.mxu0 0
    %387 = vmatpush1.bf16.msra.mxu0 %v355
    %388 = vmatprep.subr.bf16.mxu0 0
    %389 = vmatpush1.bf16.msra.mxu0 %v354
    %390 = vmatprep.subr.bf16.mxu0 0
    %391 = vmatpush1.bf16.msra.mxu0 %v353
    %392 = vmatprep.subr.bf16.mxu0 0
    %393 = vmatpush1.bf16.msra.mxu0 %v352
    %394 = vmatprep.subr.bf16.mxu0 0
    %395 = vmatpush1.bf16.msra.mxu0 %v351
    %396 = vmatprep.subr.bf16.mxu0 0
    %397 = vmatpush1.bf16.msra.mxu0 %v350
    %398 = vmatprep.subr.bf16.mxu0 0
    %399 = vmatpush2.bf16.msra.mxu0 %v365
    %400 = vmatprep.subr.bf16.mxu0 0
    %401 = vmatpush2.bf16.msra.mxu0 %v364
    %402 = vmatprep.subr.bf16.mxu0 0
    %403 = vmatpush2.bf16.msra.mxu0 %v363
    %404 = vmatprep.subr.bf16.mxu0 0
    %405 = vmatpush2.bf16.msra.mxu0 %v362
    %406 = vmatprep.subr.bf16.mxu0 0
    %407 = vmatpush2.bf16.msra.mxu0 %v361
    %408 = vmatprep.subr.bf16.mxu0 0
    %409 = vmatpush2.bf16.msra.mxu0 %v360
    %410 = vmatprep.subr.bf16.mxu0 0
    %411 = vmatpush2.bf16.msra.mxu0 %v359
    %412 = vmatprep.subr.bf16.mxu0 0
    %413 = vmatpush2.bf16.msra.mxu0 %v358
    %414 = vmatprep.mubr.bf16.mxu0 %v253
    %415 = vmatmul.mubr.bf16.gmra.mxu0 %v252
    %v416 = vpop.f32.mrf.mxu0
    %v417 = vadd.f32 0.0, %v416
    %v418 = vpop.f32.mrf.mxu0
    %v419 = vpop.f32.mrf.mxu0
    %v420 = vadd.f32 0.0, %v419
    %v421 = vpop.f32.mrf.mxu0
    %422 = vdwg.mxu0
    %v423 = vadd.f32 %v250, %v417
    %v424 = vadd.f32 %v251, %v420
    %425 = vst [vmem:[#allocation2] sm:$0xff] %v423
    %426 = vst [vmem:[#allocation2 + $0x8] sm:$0xff] %v424
    // Predicated region
    $region34: #{mlp_forward.1} parent=1 // pred_check
      %p427 = pneg %p49
    $region35: #{mlp_forward.1} parent=1 // pred_check_branch
      %429 = sbr.rel (%p427) target = $region37
    $region36: #{mlp_forward.1} parent=1 // pred_region
      %v430 = vld [vmem:[#allocation2] sm:$0xff]
      %v431 = vld [vmem:[#allocation2 + $0x8] sm:$0xff]
      %v432 = vld [vmem:[%s4] sm:$0x1]
      %v434 = vlaneseq
      %v435 = vshrl.u32 %v434, 7
      %v436 = vsub.s32 0, %v435
      %v437 = vrot.slane %v432, %v436
      %v439 = vadd.f32 %v430, %v437
      %v440 = vadd.f32 %v431, %v437
      %v441 = vpack.c.bf16 %v440, %v439
      %v443 = vunpack.c.l.b16 %v441
      %v444 = vunpack.c.h.b16 %v441
      %v445 = vpack.c.b16 %v443, %v443
      %v446 = vpack.c.b16 %v444, %v444
      %449 = vst [vmem:[%s5] sm:$0xf] %v445
      %450 = vst [vmem:[%s5 + $0x4] sm:$0xf] %v446
    $region37: #{mlp_forward.1} parent=1 // pred_fallthru
      _
    // Predicated region
    $region38: #{mlp_forward.1} parent=1 // pred_check
      _
    $region39: #{mlp_forward.1} parent=1 // pred_check_branch
      %452 = sbr.rel (0) target = $region41
    $region40: #{mlp_forward.1} parent=1 // pred_region
      _
    $region41: #{mlp_forward.1} parent=1 // pred_fallthru
      _
    // Predicated region
    $region42: #{mlp_forward.1} parent=1 // pred_check
      _
    $region43: #{mlp_forward.1} parent=1 // pred_check_branch
      %454 = sbr.rel (0) target = $region45
    $region44: #{mlp_forward.1} parent=1 // pred_region
      _
    $region45: #{mlp_forward.1} parent=1 // pred_fallthru
      _
    %455 = vsyncpa [#allocation4], 1
    %456 = vsyncpa [#allocation6], 1

</llo_original>
